<compile_context>
chip_gen: v5e
topology: v5e:2x2
jax: 0.10.0
libtpu: 0.0.40
codegen_flags: <defaults>
</compile_context>

<pallas_src>
import jax
import jax.numpy as jnp
import numpy as np
from jax.experimental import pallas as pl
from jax.experimental.pallas import tpu as pltpu


def _gm_kernel(params_ref, ifs_ref, y_ref):
    # params_ref: (S_B, 3, n)   ifs_ref: (S_B, M, L)   y_ref: (1, S_B, M)
    L = ifs_ref.shape[-1]

    mean = params_ref[:, 0, :]                          # (S_B, n)
    std = params_ref[:, 1, :]                           # (S_B, n)
    amp = jnp.abs(params_ref[:, 2, :])                  # (S_B, n)

    # Hoisted per-component coefficient: -1/(2*std^2), computed on the tiny
    # (S_B, n) params instead of the full (S_B, n, L) array.
    coef = -0.5 / (std * std)                           # (S_B, n)

    # Spatial axis L on lanes (fast), components n on sublanes.
    # torch.linspace(0, 1, 1) == [0], so guard the L == 1 case.
    denom = jnp.float32(max(L - 1, 1))
    x = (jax.lax.broadcasted_iota(jnp.int32, (1, 1, L), 2).astype(jnp.float32)
         / denom)                                       # (1, 1, L)

    d = x - mean[:, :, None]                            # (S_B, n, L)
    gauss = amp[:, :, None] * jnp.exp(d * d * coef[:, :, None])
    gm = jnp.sum(gauss, axis=1)                         # (S_B, L)  sublane reduce

    # y[s, m] = sum_l IFS[s, m, l] * gm[s, l]  — VPU multiply + lane reduce
    # (replaces the N=1 MXU matvec; gm is already lane-dense along L).
    y = jnp.sum(ifs_ref[...] * gm[:, None, :], axis=-1)  # (S_B, M)
    y_ref[0] = y.astype(y_ref.dtype)


def _pick_sample_block(samples, n, M, L, budget_bytes=24 << 20):
    """Largest divisor of `samples` whose working set fits the VMEM budget.

    Prefers leaving >= 2 grid steps so a parallel grid axis can be sharded
    across v7x's two TensorCores.
    """
    per_sample_bytes = 4 * (
        2 * M * L      # double-buffered IFS tile
        + n * L        # gauss intermediate
        + 2 * M        # double-buffered output slab
        + 2 * 3 * n    # double-buffered fused params
        + L)
    max_sb = max(1, budget_bytes // per_sample_bytes)

    divisors = [d for d in range(1, samples + 1) if samples % d == 0]
    fitting = [d for d in divisors if d <= max_sb] or [1]
    multi = [d for d in fitting if samples // d >= 2]
    return max(multi) if multi else max(fitting)


def gaussian_mixture_forward(mean, std, a, IFS, y_in=None):
    """mean/std/a: (samples, n) or (samples, n, 1) f32; IFS: (samples, M, L) f32.

    Returns y = IFS @ gm with shape (samples, M, 1), matching the torch forward.
    """
    del y_in  # unused, matching the torch forward

    def _squeeze(p):
        return p[..., 0] if p.ndim == 3 else p

    mean = _squeeze(jnp.asarray(mean, jnp.float32))
    std = _squeeze(jnp.asarray(std, jnp.float32))
    a = _squeeze(jnp.asarray(a, jnp.float32))
    IFS = jnp.asarray(IFS, jnp.float32)

    samples, n = mean.shape
    _, M, L = IFS.shape

    # Fuse the three parameter tensors into one (samples, 3, n) input.
    params = jnp.stack([mean, std, a], axis=1)

    s_b = _pick_sample_block(samples, n, M, L)
    grid = samples // s_b

    out = pl.pallas_call(
        _gm_kernel,
        out_shape=jax.ShapeDtypeStruct((grid, s_b, M), jnp.float32),
        grid_spec=pltpu.PrefetchScalarGridSpec(
            num_scalar_prefetch=0,
            grid=(grid,),
            in_specs=[
                pl.BlockSpec((s_b, 3, n), lambda s: (s, 0, 0)),
                pl.BlockSpec((s_b, M, L), lambda s: (s, 0, 0)),
            ],
            # Lane-dense output slab: (s_b, M) per step, no trailing singleton.
            out_specs=pl.BlockSpec((1, s_b, M), lambda s: (s, 0, 0)),
        ),
        compiler_params=pltpu.CompilerParams(
            dimension_semantics=("parallel",),
            vmem_limit_bytes=48 * 1024 * 1024,
        ),
    )(params, IFS)

    # Reshape to the torch output layout (samples, M, 1) outside the kernel.
    return out.reshape(samples, M)[..., None]


def _reference_forward(mean, std, a, IFS):
    # Pure-JAX reference mirroring the torch code exactly.
    samples, n = mean.shape
    L = IFS.shape[-1]
    x = jnp.tile(jnp.linspace(0.0, 1.0, L)[None, None, :], (samples, n, 1))
    gauss = jnp.abs(a)[..., None] * jnp.exp(
        -(x - mean[..., None]) ** 2 / (2.0 * std[..., None] ** 2)
    )
    gm = jnp.sum(gauss, axis=1)[..., None]          # (samples, L, 1)
    return jnp.einsum("sml,slk->smk", IFS, gm)      # (samples, M, 1)


if __name__ == "__main__":
    samples, n, M, L = 2, 10, 16, 16

    key = jax.random.PRNGKey(0)
    k_mean, k_std, k_a, k_ifs, k_y = jax.random.split(key, 5)

    # Deterministic parameter init matching the torch __init__ distributions
    # (mean ~ U(0,1), std ~ U(0.1,0.3), a ~ U(0.1,0.15)); trailing 1 squeezed.
    mean = jax.random.uniform(k_mean, (samples, n), jnp.float32, 0.0, 1.0)
    std = jax.random.uniform(k_std, (samples, n), jnp.float32, 0.1, 0.3)
    a = jax.random.uniform(k_a, (samples, n), jnp.float32, 0.1, 0.15)

    IFS = jax.random.normal(k_ifs, (samples, M, L), jnp.float32)
    y_in = jax.random.normal(k_y, (samples, M, 1), jnp.float32)  # ignored, like torch

    y = gaussian_mixture_forward(mean, std, a, IFS, y_in)
    y = jax.block_until_ready(y)

    y_ref = jax.block_until_ready(_reference_forward(mean, std, a, IFS))
    assert y.shape == (samples, M, 1)
    np.testing.assert_allclose(np.asarray(y), np.asarray(y_ref), rtol=1e-4, atol=1e-5)

    print("KERNEL_OK")
</pallas_src>

<mosaic_0001>
module attributes {stable_mosaic.version = 11 : i64} {
  func.func @_gm_kernel(%arg0: i32, %arg1: memref<1x3x10xf32, #tpu.memory_space<vmem>>, %arg2: memref<1x16x16xf32, #tpu.memory_space<vmem>>, %arg3: memref<1x1x16xf32, #tpu.memory_space<vmem>>) attributes {dimension_semantics = [#tpu.dimension_semantics<parallel>], iteration_bounds = array<i64: 2>, scalar_prefetch = 0 : i64, scratch_operands = 0 : i64, tpu.core_type = #tpu.core_type<tc>, window_params = [{transform_indices = @transform_0, window_bounds = array<i64: 1, 3, 10>}, {transform_indices = @transform_1, window_bounds = array<i64: 1, 16, 16>}, {transform_indices = @transform_2, window_bounds = array<i64: 1, 1, 16>}]} {
    %c0 = arith.constant 0 : index
    %c0_0 = arith.constant 0 : index
    %c0_1 = arith.constant 0 : index
    %0 = vector.load %arg1[%c0, %c0_0, %c0_1] : memref<1x3x10xf32, #tpu.memory_space<vmem>>, vector<1x1x10xf32>
    %1 = vector.shape_cast %0 : vector<1x1x10xf32> to vector<1x10xf32>
    %c0_2 = arith.constant 0 : index
    %c1 = arith.constant 1 : index
    %c0_3 = arith.constant 0 : index
    %2 = vector.load %arg1[%c0_2, %c1, %c0_3] : memref<1x3x10xf32, #tpu.memory_space<vmem>>, vector<1x1x10xf32>
    %3 = vector.shape_cast %2 : vector<1x1x10xf32> to vector<1x10xf32>
    %c0_4 = arith.constant 0 : index
    %c2 = arith.constant 2 : index
    %c0_5 = arith.constant 0 : index
    %4 = vector.load %arg1[%c0_4, %c2, %c0_5] : memref<1x3x10xf32, #tpu.memory_space<vmem>>, vector<1x1x10xf32>
    %5 = vector.shape_cast %4 : vector<1x1x10xf32> to vector<1x10xf32>
    %6 = math.absf %5 : vector<1x10xf32>
    %7 = arith.mulf %3, %3 : vector<1x10xf32>
    %cst = arith.constant -5.000000e-01 : f32
    %8 = vector.broadcast %cst : f32 to vector<1x10xf32>
    %9 = arith.divf %8, %7 : vector<1x10xf32>
    %10 = tpu.iota {dimensions = array<i32: 2>} : vector<1x1x16xi32>
    %11 = arith.sitofp %10 : vector<1x1x16xi32> to vector<1x1x16xf32>
    %cst_6 = arith.constant 1.500000e+01 : f32
    %12 = vector.broadcast %cst_6 : f32 to vector<1x1x16xf32>
    %13 = arith.divf %11, %12 : vector<1x1x16xf32>
    %14 = vector.shape_cast %1 : vector<1x10xf32> to vector<1x10x1xf32>
    %15 = vector.broadcast %13 : vector<1x1x16xf32> to vector<1x10x16xf32>
    %16 = vector.broadcast %14 : vector<1x10x1xf32> to vector<1x10x16xf32>
    %17 = arith.subf %15, %16 : vector<1x10x16xf32>
    %18 = vector.shape_cast %6 : vector<1x10xf32> to vector<1x10x1xf32>
    %19 = arith.mulf %17, %17 : vector<1x10x16xf32>
    %20 = vector.shape_cast %9 : vector<1x10xf32> to vector<1x10x1xf32>
    %21 = vector.broadcast %20 : vector<1x10x1xf32> to vector<1x10x16xf32>
    %22 = arith.mulf %19, %21 : vector<1x10x16xf32>
    %23 = math.exp %22 : vector<1x10x16xf32>
    %24 = vector.broadcast %18 : vector<1x10x1xf32> to vector<1x10x16xf32>
    %25 = arith.mulf %24, %23 : vector<1x10x16xf32>
    %cst_7 = arith.constant dense<0.000000e+00> : vector<1x16xf32>
    %26 = vector.multi_reduction <add>, %25, %cst_7 [1] : vector<1x10x16xf32> to vector<1x16xf32>
    %c0_8 = arith.constant 0 : index
    %c0_9 = arith.constant 0 : index
    %c0_10 = arith.constant 0 : index
    %27 = vector.load %arg2[%c0_8, %c0_9, %c0_10] : memref<1x16x16xf32, #tpu.memory_space<vmem>>, vector<1x16x16xf32>
    %28 = vector.shape_cast %26 : vector<1x16xf32> to vector<1x1x16xf32>
    %29 = vector.broadcast %28 : vector<1x1x16xf32> to vector<1x16x16xf32>
    %30 = arith.mulf %27, %29 : vector<1x16x16xf32>
    %cst_11 = arith.constant dense<0.000000e+00> : vector<1x16xf32>
    %31 = vector.multi_reduction <add>, %30, %cst_11 [2] : vector<1x16x16xf32> to vector<1x16xf32>
    %c0_12 = arith.constant 0 : index
    %c0_13 = arith.constant 0 : index
    %c0_14 = arith.constant 0 : index
    %32 = vector.load %arg3[%c0_12, %c0_13, %c0_14] : memref<1x1x16xf32, #tpu.memory_space<vmem>>, vector<1x1x16xf32>
    %33 = vector.shape_cast %32 : vector<1x1x16xf32> to vector<1x16xf32>
    %34 = vector.shape_cast %31 : vector<1x16xf32> to vector<1x1x16xf32>
    tpu.vector_store %arg3[%c0_12, %c0_13, %c0_14], %34 {strides = array<i32>} : memref<1x1x16xf32, #tpu.memory_space<vmem>>, vector<1x1x16xf32>,
    return
  }
  func.func @transform_0(%arg0: i32) -> (i32, i32, i32) {
    %c0_i32 = arith.constant 0 : i32
    %c0_i32_0 = arith.constant 0 : i32
    %c0_i32_1 = arith.constant 0 : i32
    return %arg0, %c0_i32, %c0_i32_0 : i32, i32, i32
  }
  func.func @transform_1(%arg0: i32) -> (i32, i32, i32) {
    %c0_i32 = arith.constant 0 : i32
    %c0_i32_0 = arith.constant 0 : i32
    %c0_i32_1 = arith.constant 0 : i32
    return %arg0, %c0_i32, %c0_i32_0 : i32, i32, i32
  }
  func.func @transform_2(%arg0: i32) -> (i32, i32, i32) {
    %c0_i32 = arith.constant 0 : i32
    %c0_i32_0 = arith.constant 0 : i32
    %c0_i32_1 = arith.constant 0 : i32
    return %arg0, %c0_i32, %c0_i32_0 : i32, i32, i32
  }
}

</mosaic_0001>

<llo_original>
// kernel: tpu_custom_call.1
$region0: #{tpu_custom_call.1}
  #allocation0 [shape = 'u32[]', space=smem, size = 0x4, offset = 0x4, fixed_abs, tag = 'smem constant byte address 0x4 - core index']
  #allocation1 [shape = 'u32[72,128]{1,0:T(1,128)}', space=vmem, size = 0x9000, scoped, tag = 'internal scratch']
  %s0 = inlined_call_operand.vmem [shape: f32[2,3,10], index: 0, kind: input, shape index: {}]
  %s1 = inlined_call_operand.hbm [shape: f32[2,16,16], index: 1, kind: input, shape index: {}]
  %s2 = inlined_call_operand.hbm [shape: f32[2,1,16], index: 2, kind: output, shape index: {}]
  %s3 = sld [smem:[#allocation0]]
  $region45: #{tpu_custom_call.1} parent=0
    _
  %s5 = ssub.s32 1, %s3
  %s6 = scalar_select 0, %s5, %s3
  $region1: #{tpu_custom_call.1} parent=0
    #allocation2 [shape = 'u8[16384]{0}', space=vmem, size = 0x4000, scoped, tag = 'input window, operand 1']
    #allocation3 [shape = 's32[2]{0}', space=sflag, size = 0x8, scoped, tag = 'scoped memory for tpu_custom_call.1']
    #allocation4 [shape = 's32[2]{0}', space=sflag, size = 0x8, scoped, tag = 'scoped memory for tpu_custom_call.1']
    #allocation5 [shape = 'u8[1024]{0}', space=vmem, size = 0x400, scoped, tag = 'output window, operand 0']
    %7 = vsyncpa [#allocation3], 0
    %s8 = scalar_lea.sflag [#allocation3], 1
    %9 = vsyncpa %s8, 0
    %10 = vsyncpa [#allocation4], 0
    %s11 = scalar_lea.sflag [#allocation4], 1
    %12 = vsyncpa %s11, 0
    loop: start=0, step=1, limit=4
    $region2: #{tpu_custom_call.1} parent=1 // loop_pre_header
      _
    $region3: #{tpu_custom_call.1} parent=1 // loop_header
      %s14 = sphi 0, %s18
      %p15 = scmp.ge.s32.totalorder %s14, 4
      %s24 = sphi 0, %s26
      %s27 = sphi 0, %s24
      %s28 = sphi 0, %s27
      %s44 = sphi 0, %s28
      %s50 = sphi 0, %s52
      %s53 = sphi 0, %s50
      %s54 = sphi 0, %s53
      %s70 = sphi 0, %s54
      %s76 = sphi 0, %s78
      %s79 = sphi 0, %s76
      %s80 = sphi 0, %s79
      %s96 = sphi 0, %s80
    $region4: #{tpu_custom_call.1} parent=1 // loop_header_branch
      %17 = sbr.rel (%p15) target = $region8
    $region5: #{tpu_custom_call.1} parent=1 // loop_body
      %s19 = ssub.s32 %s14, 1
      %s20 = ssub.s32 %s14, 2
      %s21 = sadd.s32 %s14, 1
      %s22 = ssub.s32 %s14, %s21
      %p23 = scmp.eq.s32.totalorder %s22, 0
      %s25 = sadd.s32 %s24, 1
      %s26 = scalar_select %p23, %s24, %s25
      %p29 = pneg %p23
      %p30 = scmp.eq.s32.totalorder %s14, 1
      %p31 = por %p29, %p30
      %p32 = scmp.ne.s32.totalorder %s24, %s27
      %p33 = scmp.eq.s32.totalorder %s14, 0
      %p34 = por %p32, %p33
      %p35 = scmp.ne.s32.totalorder %s24, %s27
      %p36 = scmp.eq.s32.totalorder %s19, 1
      %p37 = por %p35, %p36
      %p38 = scmp.ne.s32.totalorder %s27, %s28
      %p39 = scmp.eq.s32.totalorder %s19, 0
      %p40 = por %p38, %p39
      %p41 = scmp.ne.s32.totalorder %s27, %s28
      %p42 = scmp.eq.s32.totalorder %s20, 1
      %p43 = por %p41, %p42
      %p45 = scmp.ne.s32.totalorder %s28, %s44
      %p46 = scmp.eq.s32.totalorder %s20, 0
      %p47 = por %p45, %p46
      %s48 = ssub.s32 %s14, %s21
      %p49 = scmp.eq.s32.totalorder %s48, 0
      %s51 = sadd.s32 %s50, 1
      %s52 = scalar_select %p49, %s50, %s51
      %p55 = pneg %p49
      %p56 = scmp.eq.s32.totalorder %s14, 1
      %p57 = por %p55, %p56
      %p58 = scmp.ne.s32.totalorder %s50, %s53
      %p59 = scmp.eq.s32.totalorder %s14, 0
      %p60 = por %p58, %p59
      %p61 = scmp.ne.s32.totalorder %s50, %s53
      %p62 = scmp.eq.s32.totalorder %s19, 1
      %p63 = por %p61, %p62
      %p64 = scmp.ne.s32.totalorder %s53, %s54
      %p65 = scmp.eq.s32.totalorder %s19, 0
      %p66 = por %p64, %p65
      %p67 = scmp.ne.s32.totalorder %s53, %s54
      %p68 = scmp.eq.s32.totalorder %s20, 1
      %p69 = por %p67, %p68
      %p71 = scmp.ne.s32.totalorder %s54, %s70
      %p72 = scmp.eq.s32.totalorder %s20, 0
      %p73 = por %p71, %p72
      %s74 = ssub.s32 %s14, %s21
      %p75 = scmp.eq.s32.totalorder %s74, 0
      %s77 = sadd.s32 %s76, 1
      %s78 = scalar_select %p75, %s76, %s77
      %p81 = pneg %p75
      %p82 = scmp.eq.s32.totalorder %s14, 1
      %p83 = por %p81, %p82
      %p84 = scmp.ne.s32.totalorder %s76, %s79
      %p85 = scmp.eq.s32.totalorder %s14, 0
      %p86 = por %p84, %p85
      %p87 = scmp.ne.s32.totalorder %s76, %s79
      %p88 = scmp.eq.s32.totalorder %s19, 1
      %p89 = por %p87, %p88
      %p90 = scmp.ne.s32.totalorder %s79, %s80
      %p91 = scmp.eq.s32.totalorder %s19, 0
      %p92 = por %p90, %p91
      %p93 = scmp.ne.s32.totalorder %s79, %s80
      %p94 = scmp.eq.s32.totalorder %s20, 1
      %p95 = por %p93, %p94
      %p97 = scmp.ne.s32.totalorder %s80, %s96
      %p98 = scmp.eq.s32.totalorder %s20, 0
      %p99 = por %p97, %p98
      %p100 = scmp.le.s32.totalorder 1, %s14
      %p101 = scmp.lt.s32.totalorder %s14, 3
      %p102 = pnand %p100, %p101
      %p103 = pneg %p102
      // Predicated region
      $region9: #{tpu_custom_call.1} parent=5 // pred_check
        _
      $region10: #{tpu_custom_call.1} parent=5 // pred_check_branch
        %105 = sbr.rel (%p102) target = $region12
      $region11: #{tpu_custom_call.1} parent=5 // pred_region
        %s106 = ssub.s32 %s14, 1
      $region12: #{tpu_custom_call.1} parent=5 // pred_fallthru
        _
      %p107 = scmp.lt.s32.totalorder %s14, 2
      // Predicated region
      $region13: #{tpu_custom_call.1} parent=5 // pred_check
        %p108 = pneg %p107
      $region14: #{tpu_custom_call.1} parent=5 // pred_check_branch
        %110 = sbr.rel (%p108) target = $region16
      $region15: #{tpu_custom_call.1} parent=5 // pred_region
        // Predicated region
        $region17: #{tpu_custom_call.1} parent=15 // pred_check
          %p111 = pneg %p34
        $region18: #{tpu_custom_call.1} parent=15 // pred_check_branch
          %113 = sbr.rel (%p111) target = $region20
        $region19: #{tpu_custom_call.1} parent=15 // pred_region
          %p114 = scmp.lt.s32.totalorder %s14, 1
          %s115 = scalar_select %p114, %s14, 1
          %s116 = smul.addr %s115, 4
          %s117 = scalar_lea.vmem %s0, %s116
        $region20: #{tpu_custom_call.1} parent=15 // pred_fallthru
          _
        // Predicated region
        $region21: #{tpu_custom_call.1} parent=15 // pred_check
          %p118 = pneg %p60
        $region22: #{tpu_custom_call.1} parent=15 // pred_check_branch
          %120 = sbr.rel (%p118) target = $region24
        $region23: #{tpu_custom_call.1} parent=15 // pred_region
          %s121 = sand.u32 %s50, 1
          %s122 = scalar_lea.sflag [#allocation3], %s121
          %s123 = sand.u32 %s50, 1
          %s124 = smul.addr %s123, 16
          %s125 = scalar_lea.vmem [#allocation2], %s124
          %127 = vsyncadd %s122, 0
          %s128 = smul.addr %s14, 2
          %s129 = smul.addr %s128, 8
          %s130 = scalar_lea.hbm %s1, %s129
          %s131 = sshll.u32 %s130, 4
          %s132 = int_to_ptr.hbm [resolvable:$true] %s131
          %s133 = sshll.u32 %s125, 4
          %s134 = int_to_ptr.vmem [resolvable:$true] %s133
          %139 = dma.hbm_to_vmem [thread:$0]  %s132, 256, %s134, %s122, 128, 128, 8
        $region24: #{tpu_custom_call.1} parent=15 // pred_fallthru
          _
      $region16: #{tpu_custom_call.1} parent=5 // pred_fallthru
        _
      %p140 = scmp.le.s32.totalorder 1, %s14
      %p141 = scmp.lt.s32.totalorder %s14, 3
      %p142 = pnand %p140, %p141
      %p143 = pneg %p142
      // Predicated region
      $region25: #{tpu_custom_call.1} parent=5 // pred_check
        _
      $region26: #{tpu_custom_call.1} parent=5 // pred_check_branch
        %145 = sbr.rel (%p142) target = $region28
      $region27: #{tpu_custom_call.1} parent=5 // pred_region
        %s146 = ssub.s32 %s14, 1
        %s147 = sand.u32 %s53, 1
        %s148 = scalar_lea.sflag [#allocation3], %s147
        %s149 = sand.u32 %s53, 1
        %s150 = smul.addr %s149, 16
        %s151 = scalar_lea.vmem [#allocation2], %s150
        // Predicated region
        $region29: #{tpu_custom_call.1} parent=27 // pred_check
          %p152 = pneg %p66
        $region30: #{tpu_custom_call.1} parent=27 // pred_check_branch
          %154 = sbr.rel (%p152) target = $region32
        $region31: #{tpu_custom_call.1} parent=27 // pred_region
          %156 = dma.done %s148, 256
        $region32: #{tpu_custom_call.1} parent=27 // pred_fallthru
          _
        %p157 = scmp.lt.s32.totalorder %s19, 1
        %s158 = scalar_select %p157, %s19, 1
        %s159 = smul.addr %s158, 4
        %s160 = scalar_lea.vmem %s0, %s159
        %p161 = pneg %p40
        %p162 = pneg %p37
        %s163 = sand.u32 %s53, 1
        %s164 = scalar_lea.sflag [#allocation3], %s163
        %s165 = sand.u32 %s53, 1
        %s166 = smul.addr %s165, 16
        %s167 = scalar_lea.vmem [#allocation2], %s166
        %p168 = pneg %p66
        %p169 = pneg %p63
        %p170 = pneg %p92
        %p171 = pneg %p89
        %s172 = sand.u32 %s79, 1
        %s173 = scalar_lea.sflag [#allocation4], %s172
        %s174 = sand.u32 %s79, 1
        %s175 = scalar_lea.vmem [#allocation5], %s174
        %p176 = scmp.lt.s32.totalorder %s19, 1
        %s177 = scalar_select %p176, %s19, 1
        %s178 = smul.addr %s177, 4
        %s179 = scalar_lea.vmem %s0, %s178
        %v180 = vld [vmem:[%s179] sm:$0x1]
        %v181 = vld [vmem:[%s179 + $0x1] sm:$0x1]
        %v182 = vld [vmem:[%s179 + $0x2] sm:$0x1]
        %v183 = vand.u32 2147483647, %v182
        %v184 = vmul.f32 %v181, %v181
        %v185 = vrcp.pop %v184
        %v186 = vmul.f32 %v184, %v185
        %v187 = vsub.f32 1.0, %v186
        %v188 = vmul.f32 %v185, %v187
        %v189 = vadd.f32 %v185, %v188
        %vm190 = vweird.f32 %v184
        %vm191 = vweird.f32 %v185
        %vm192 = vmor %vm190, %vm191
        %v193 = vsel %vm192, %v185, %v189
        %v194 = vand.u32 2147483647, %v184
        %vm195 = vcmp.eq.f32.partialorder %v194, 8.507059e+37
        %v196 = vand.u32 %v184, 2147483648
        %v197 = vor.u32 1.1754944e-38, %v196
        %v198 = vsel %vm195, %v197, %v193
        %v199 = vmul.f32 -0.5, %v198
        %v200 = vlaneseq
        %v201 = vand.u32 %v200, 127
        %v202 = vcvt.s32.f32 %v201
        %v203 = vrcp.pop 15.0
        %v204 = vmul.f32 15.0, %v203
        %v205 = vsub.f32 1.0, %v204
        %v206 = vmul.f32 %v203, %v205
        %v207 = vadd.f32 %v203, %v206
        %vm208 = vweird.f32 %v203
        %v209 = vsel %vm208, %v203, %v207
        %v210 = vmul.f32 %v202, %v209
        %v211 = vperm.slane %v180, 0
        %v212 = vlaneseq
        %v213 = vshrl.u32 %v212, 7
        %215 = vset.pattern.permute.xlu0 %v213
        %216 = vperm.xlu0 %215, %v211
        %v217 = vpop.permute.xlu0 %216
        %v218 = vlaneseq
        %v219 = vshrl.u32 %v218, 7
        %v220 = vadd.s32 %v219, 8
        %221 = vset.pattern.permute.xlu0 %v220
        %222 = vperm.xlu0 %221, %v211
        %v223 = vpop.permute.xlu0 %222
        %v224 = vsub.f32 %v210, %v217
        %v225 = vsub.f32 %v210, %v223
        %v226 = vperm.slane %v183, 0
        %v227 = vlaneseq
        %v228 = vshrl.u32 %v227, 7
        %230 = vset.pattern.permute.xlu0 %v228
        %231 = vperm.xlu0 %230, %v226
        %v232 = vpop.permute.xlu0 %231
        %v233 = vlaneseq
        %v234 = vshrl.u32 %v233, 7
        %v235 = vadd.s32 %v234, 8
        %236 = vset.pattern.permute.xlu0 %v235
        %237 = vperm.xlu0 %236, %v226
        %v238 = vpop.permute.xlu0 %237
        %v239 = vmul.f32 %v224, %v224
        %v240 = vmul.f32 %v225, %v225
        %v241 = vperm.slane %v199, 0
        %v242 = vlaneseq
        %v243 = vshrl.u32 %v242, 7
        %245 = vset.pattern.permute.xlu0 %v243
        %246 = vperm.xlu0 %245, %v241
        %v247 = vpop.permute.xlu0 %246
        %v248 = vlaneseq
        %v249 = vshrl.u32 %v248, 7
        %v250 = vadd.s32 %v249, 8
        %251 = vset.pattern.permute.xlu0 %v250
        %252 = vperm.xlu0 %251, %v241
        %v253 = vpop.permute.xlu0 %252
        %v254 = vmul.f32 %v239, %v247
        %v255 = vmul.f32 %v240, %v253
        %v256 = vmul.f32 %v254, 1.442695
        %v257 = vpow.pop %v256
        %v258 = vmul.f32 %v255, 1.442695
        %v259 = vpow.pop %v258
        %v260 = vmul.f32 %v232, %v257
        %v261 = vmul.f32 %v238, %v259
        %vm262 = vcmask 130048
        %v263 = vsel %vm262, %v260, 0.0
        %vm264 = vcmask 123904
        %v265 = vsel %vm264, %v261, 0.0
        %v266 = vadd.f32 %v263, %v265
        %v267 = vrot.slane %v266, 4
        %v268 = vadd.f32 %v266, %v267
        %v269 = vrot.slane %v268, 2
        %v270 = vadd.f32 %v268, %v269
        %v271 = vrot.slane %v270, 1
        %v272 = vadd.f32 %v270, %v271
        %v273 = vld [vmem:[%s151] sm:$0xff]
        %v274 = vld [vmem:[%s151 + $0x8] sm:$0xff]
        %v275 = vmul.f32 %v273, %v272
        %v276 = vmul.f32 %v274, %v272
        %v277 = vsel %vm262, %v275, 0.0
        %278 = vadd.xlane.f32.xlu0 %v277
        %v279 = vpop.xlane.xlu0 %278
        %v280 = vsel %vm262, %v276, 0.0
        %281 = vadd.xlane.f32.xlu0 %v280
        %v282 = vpop.xlane.xlu0 %281
        %v285 = vperm.slane %v279, %v201
        %v286 = vadd.s32 %v201, 4294967288
        %v287 = vperm.slane %v282, %v286
        %vm288 = vcmask 130112
        %v289 = vsel %vm288, %v287, %v285
        %vm291 = vcmask 122880
        %292 = vst.msk [vmem:[%s175] sm:$0x1] %vm291, %v289
        %s293 = sand.u32 %s79, 1
        %s294 = scalar_lea.sflag [#allocation4], %s293
        %s295 = sand.u32 %s79, 1
        %s296 = scalar_lea.vmem [#allocation5], %s295
        // Predicated region
        $region33: #{tpu_custom_call.1} parent=27 // pred_check
          %p297 = pneg %p89
        $region34: #{tpu_custom_call.1} parent=27 // pred_check_branch
          %299 = sbr.rel (%p297) target = $region36
        $region35: #{tpu_custom_call.1} parent=27 // pred_region
          %301 = vsyncadd %s294, 0
          %s302 = scalar_lea.hbm %s2, %s19
          %s304 = sshll.u32 %s296, 4
          %s305 = int_to_ptr.vmem [resolvable:$true] %s304
          %s306 = sshll.u32 %s302, 4
          %s307 = int_to_ptr.hbm [resolvable:$true] %s306
          %309 = dma.vmem_to_hbm [thread:$0]  %s305, 16, %s307, %s294
        $region36: #{tpu_custom_call.1} parent=27 // pred_fallthru
          _
      $region28: #{tpu_custom_call.1} parent=5 // pred_fallthru
        _
      %p310 = scmp.le.s32.totalorder 2, %s14
      // Predicated region
      $region37: #{tpu_custom_call.1} parent=5 // pred_check
        %p311 = pneg %p310
      $region38: #{tpu_custom_call.1} parent=5 // pred_check_branch
        %313 = sbr.rel (%p311) target = $region40
      $region39: #{tpu_custom_call.1} parent=5 // pred_region
        %s314 = ssub.s32 %s14, 2
        // Predicated region
        $region41: #{tpu_custom_call.1} parent=39 // pred_check
          %p315 = pneg %p95
        $region42: #{tpu_custom_call.1} parent=39 // pred_check_branch
          %317 = sbr.rel (%p315) target = $region44
        $region43: #{tpu_custom_call.1} parent=39 // pred_region
          %s318 = sand.u32 %s80, 1
          %s319 = scalar_lea.sflag [#allocation4], %s318
          %s320 = sand.u32 %s80, 1
          %s321 = scalar_lea.vmem [#allocation5], %s320
          %323 = dma.done %s319, 16
        $region44: #{tpu_custom_call.1} parent=39 // pred_fallthru
          _
      $region40: #{tpu_custom_call.1} parent=5 // pred_fallthru
        _
    $region6: #{tpu_custom_call.1} parent=1 // loop_footer
      %s18 = sadd.s32 1, %s14
    $region7: #{tpu_custom_call.1} parent=1 // loop_footer_branch
      %13 = sbr.rel target = $region3
    $region8: #{tpu_custom_call.1} parent=1 // loop_exit
      _
    %324 = vsyncpa [#allocation3], 1
    %s325 = scalar_lea.sflag [#allocation3], 1
    %326 = vsyncpa %s325, 1
    %327 = vsyncpa [#allocation4], 1
    %s328 = scalar_lea.sflag [#allocation4], 1
    %329 = vsyncpa %s328, 1

</llo_original>
